<compile_context>
chip_gen: v6e
topology: v6e:2x2x1
jax: 0.10.0
libtpu: 0.0.40
codegen_flags: <defaults>
</compile_context>

<pallas_src>
import functools

import jax
import jax.numpy as jnp
from jax import lax
from jax.experimental import pallas as pl
from jax.experimental.pallas import tpu as pltpu

EPS = 1e-5


# ----------------------------- kernels ------------------------------------ #

def _conv1_bn_relu_conv2(x_bf16, w1_bf16, w2_bf16, scale1, shift1):
    """conv1 -> folded-BN1 affine -> ReLU -> conv2 for one (Cin, T) tile.

    MXU operands are bf16, accumulation is f32, BN math is f32.
    Returns z2: (C2, T) f32.
    """
    z1 = jnp.dot(w1_bf16, x_bf16, preferred_element_type=jnp.float32)
    a = jnp.maximum(z1 * scale1 + shift1, 0.0)
    return jnp.dot(w2_bf16, a.astype(jnp.bfloat16),
                   preferred_element_type=jnp.float32)


def _stats1_kernel(x_ref, w1_ref, s_ref, ss_ref):
    """Accumulate per-channel sum / sumsq of z1 = conv1(x) over pixel tiles."""
    i = pl.program_id(1)
    z1 = jnp.dot(w1_ref[...], x_ref[...], preferred_element_type=jnp.float32)
    # Zero-padded pixels give z1 == 0 exactly -> no tail mask needed here.
    s = jnp.sum(z1, axis=1, keepdims=True)
    ss = jnp.sum(z1 * z1, axis=1, keepdims=True)

    @pl.when(i == 0)
    def _():
        s_ref[...] = jnp.zeros_like(s_ref)
        ss_ref[...] = jnp.zeros_like(ss_ref)

    s_ref[...] += s
    ss_ref[...] += ss


def _stats2_kernel(x_ref, w1_ref, w2_ref, sc1_ref, sh1_ref, s_ref, ss_ref,
                   *, tile_p, valid_hw, masked):
    """Accumulate per-channel sum / sumsq of z2 = conv2(relu(bn1(conv1(x))))."""
    i = pl.program_id(1)
    z2 = _conv1_bn_relu_conv2(x_ref[...], w1_ref[...], w2_ref[...],
                              sc1_ref[...], sh1_ref[...])
    if masked:  # static: only when HW was padded up to a multiple of 128
        pix = lax.broadcasted_iota(jnp.int32, z2.shape, 1) + i * tile_p
        z2 = jnp.where(pix < valid_hw, z2, 0.0)
    s = jnp.sum(z2, axis=1, keepdims=True)
    ss = jnp.sum(z2 * z2, axis=1, keepdims=True)

    @pl.when(i == 0)
    def _():
        s_ref[...] = jnp.zeros_like(s_ref)
        ss_ref[...] = jnp.zeros_like(ss_ref)

    s_ref[...] += s
    ss_ref[...] += ss


def _finalize_kernel(x_ref, w1_ref, w2_ref, sc1_ref, sh1_ref, sc2_ref, sh2_ref,
                     o_ref):
    """Fused conv1/bn1/relu/conv2/bn2 + identity + relu for one tile."""
    x = x_ref[...]                                   # bf16 (also the residual)
    z2 = _conv1_bn_relu_conv2(x, w1_ref[...], w2_ref[...],
                              sc1_ref[...], sh1_ref[...])
    y = z2 * sc2_ref[...] + sh2_ref[...] + x.astype(jnp.float32)
    o_ref[...] = jnp.maximum(y, 0.0).astype(o_ref.dtype)


# ----------------------------- helpers ------------------------------------- #

def _vmem_capacity_bytes():
    try:
        return int(pltpu.get_tpu_info().vmem_capacity_bytes)
    except Exception:                    # conservative fallback (v7x per-TC)
        return 64 << 20


def _pick_tile_p(hw_pad, max_tile):
    """Largest multiple-of-128 divisor of hw_pad that is <= max_tile."""
    t = min(max_tile, hw_pad)
    t -= t % 128
    t = max(t, 128)
    while t > 128 and hw_pad % t:
        t -= 128
    return t


def _compiler_params(semantics, block_bytes, vmem_cap):
    # Raise the scoped VMEM limit only when the double-buffered working set
    # would exceed the smallest default scoped limit (16 MiB on v5e).
    limit = None
    if block_bytes > (12 << 20):
        limit = min(int(block_bytes * 1.5) + (8 << 20), int(vmem_cap * 3 // 4))
    return pltpu.CompilerParams(dimension_semantics=semantics,
                                vmem_limit_bytes=limit)


def _folded_bn_affine(sum_parts, sumsq_parts, count, gamma, beta, eps):
    """Combine per-batch partials into a per-channel BN affine (scale, shift).

    TODO(synk): E[z^2]-E[z]^2 in f32 can cancel for huge N*H*W when
    |mean| >> std; switch to a Chan/Welford merge of centered partials if that
    regime matters.
    """
    s = jnp.sum(sum_parts, axis=0).reshape(-1)
    ss = jnp.sum(sumsq_parts, axis=0).reshape(-1)
    mean = s / count
    var = jnp.maximum(ss / count - mean * mean, 0.0)      # biased variance
    scale = gamma.astype(jnp.float32) * lax.rsqrt(var + eps)
    shift = beta.astype(jnp.float32) - mean * scale
    return scale.reshape(-1, 1), shift.reshape(-1, 1)


# ----------------------------- wrapper ------------------------------------- #

def basic_block_forward(x_nchw, w1_oihw, w2_oihw, gamma1, beta1, gamma2, beta2,
                        *, max_tile_p=32768, eps=EPS):
    """Pallas forward of BasicBlock (stride=1, downsample=None). NCHW in/out.

    Training-mode BN (batch stats, biased variance), like the torch module in
    train() mode.
    """
    # TODO(synk): stride != 1 / downsample path not implemented (default
    # BasicBlock config is stride=1, downsample=None; anything else would also
    # break the residual add in the original PyTorch module).
    # TODO(synk): BN running_mean / running_var buffers are not updated.
    n, cin, h, w = x_nchw.shape
    c1 = w1_oihw.shape[0]
    c2 = w2_oihw.shape[0]
    assert c2 == cin, "identity residual requires planes == inplanes"

    hw = h * w
    hw_pad = ((hw + 127) // 128) * 128
    p_valid = n * hw

    # Free reshape (no transpose); cast x to bf16 once for transport.
    x3 = x_nchw.reshape(n, cin, hw).astype(jnp.bfloat16)
    if hw_pad != hw:
        x3 = jnp.pad(x3, ((0, 0), (0, 0), (0, hw_pad - hw)))

    w1 = w1_oihw.reshape(c1, cin).astype(jnp.bfloat16)    # cast once, in wrapper
    w2 = w2_oihw.reshape(c2, c1).astype(jnp.bfloat16)

    # VMEM-aware tile size: 2 buffers x (bf16 x-block + f32 out-block) plus
    # kernel intermediates, kept under ~40% of physical VMEM and never above
    # ~28 MiB (v7x: 64 MiB physical / 32 MiB scoped default).
    vmem_cap = _vmem_capacity_bytes()
    budget = min(int(vmem_cap * 0.4), 28 << 20)
    per_px = 4 * cin + 6 * c1 + 12 * c2
    tp = _pick_tile_p(hw_pad, min(max_tile_p, max(128, budget // per_px)))
    nt = hw_pad // tp
    block_bytes = per_px * tp + 2 * (c1 * cin + c2 * c1)

    # BlockSpecs: batch on a squeezed grid axis, channels on sublanes, pixels
    # on lanes (lane-dense, multiple-of-128 stores).
    x_spec = pl.BlockSpec((pl.Squeezed(), cin, tp), lambda nb, i: (nb, 0, i))
    w1_spec = pl.BlockSpec((c1, cin), lambda nb, i: (0, 0))   # resident weights
    w2_spec = pl.BlockSpec((c2, c1), lambda nb, i: (0, 0))
    col = lambda c: pl.BlockSpec((c, 1), lambda nb, i: (0, 0))
    acc = lambda c: pl.BlockSpec((pl.Squeezed(), c, 1), lambda nb, i: (nb, 0, 0))
    out_spec = pl.BlockSpec((pl.Squeezed(), c2, tp), lambda nb, i: (nb, 0, i))

    stats_params = _compiler_params(("parallel", "arbitrary"), block_bytes,
                                    vmem_cap)
    final_params = _compiler_params(("parallel", "parallel"), block_bytes,
                                    vmem_cap)

    # Pass 1: per-(batch, channel) sum / sumsq of conv1(x), accumulated in a
    # resident output block across the pixel-tile axis (one writeback / batch).
    s1, ss1 = pl.pallas_call(
        _stats1_kernel,
        out_shape=(jax.ShapeDtypeStruct((n, c1, 1), jnp.float32),
                   jax.ShapeDtypeStruct((n, c1, 1), jnp.float32)),
        grid=(n, nt),
        in_specs=[x_spec, w1_spec],
        out_specs=(acc(c1), acc(c1)),
        compiler_params=stats_params,
    )(x3, w1)
    sc1, sh1 = _folded_bn_affine(s1, ss1, p_valid, gamma1, beta1, eps)

    # Pass 2: per-(batch, channel) sum / sumsq of conv2(relu(bn1(conv1(x)))),
    # recomputed from x (cheaper than an extra HBM round trip of z1).
    stats2 = functools.partial(_stats2_kernel, tile_p=tp, valid_hw=hw,
                               masked=(hw_pad != hw))
    s2, ss2 = pl.pallas_call(
        stats2,
        out_shape=(jax.ShapeDtypeStruct((n, c2, 1), jnp.float32),
                   jax.ShapeDtypeStruct((n, c2, 1), jnp.float32)),
        grid=(n, nt),
        in_specs=[x_spec, w1_spec, w2_spec, col(c1), col(c1)],
        out_specs=(acc(c2), acc(c2)),
        compiler_params=stats_params,
    )(x3, w1, w2, sc1, sh1)
    sc2, sh2 = _folded_bn_affine(s2, ss2, p_valid, gamma2, beta2, eps)

    # Pass 3: fused forward + residual + ReLU, lane-dense stores in the
    # original (N, C, H*W) layout (free reshape back to NCHW, no transpose).
    out3 = pl.pallas_call(
        _finalize_kernel,
        out_shape=jax.ShapeDtypeStruct((n, c2, hw_pad), jnp.float32),
        grid=(n, nt),
        in_specs=[x_spec, w1_spec, w2_spec, col(c1), col(c1), col(c2), col(c2)],
        out_specs=out_spec,
        compiler_params=final_params,
    )(x3, w1, w2, sc1, sh1, sc2, sh2)

    if hw_pad != hw:
        out3 = out3[:, :, :hw]
    return out3.reshape(n, c2, h, w)


# ----------------------------- reference ----------------------------------- #

def reference_forward(x, w1, w2, g1, b1, g2, b2, *, eps=EPS,
                      transport_dtype=jnp.float32):
    """Pure-JAX reference (training-mode BN, biased var).  transport_dtype set
    to bfloat16 mirrors the kernel's bf16 x/weight transport (f32 accumulate,
    f32 BN math); float32 gives the exact reference."""
    xt = x.astype(transport_dtype)

    def conv1x1(inp, wt):
        return jnp.einsum(
            "nchw,oc->nohw",
            inp.astype(transport_dtype),
            wt.reshape(wt.shape[0], wt.shape[1]).astype(transport_dtype),
            preferred_element_type=jnp.float32)

    def bn(z, g, b):
        m = jnp.mean(z, axis=(0, 2, 3), keepdims=True)
        v = jnp.mean((z - m) ** 2, axis=(0, 2, 3), keepdims=True)
        return ((z - m) * lax.rsqrt(v + eps) * g.reshape(1, -1, 1, 1)
                + b.reshape(1, -1, 1, 1))

    out = jnp.maximum(bn(conv1x1(xt, w1), g1, b1), 0.0)
    out = bn(conv1x1(out, w2), g2, b2)
    return jnp.maximum(out + xt.astype(jnp.float32), 0.0)


if __name__ == "__main__":
    # Small shapes consistent with the module; stride=1 / downsample=None
    # forces planes == inplanes for the residual add.
    N, C, H, W = 2, 4, 16, 16

    key = jax.random.PRNGKey(0)
    kx, k1, k2, kg1, kb1, kg2, kb2 = jax.random.split(key, 7)

    x = jax.random.normal(kx, (N, C, H, W), dtype=jnp.float32)
    w1 = jax.random.normal(k1, (C, C, 1, 1), dtype=jnp.float32) * (2.0 / C) ** 0.5
    w2 = jax.random.normal(k2, (C, C, 1, 1), dtype=jnp.float32) * (2.0 / C) ** 0.5
    # Non-trivial BN affine so gamma/beta paths are actually exercised.
    gamma1 = 1.0 + 0.1 * jax.random.normal(kg1, (C,), dtype=jnp.float32)
    beta1 = 0.1 * jax.random.normal(kb1, (C,), dtype=jnp.float32)
    gamma2 = 1.0 + 0.1 * jax.random.normal(kg2, (C,), dtype=jnp.float32)
    beta2 = 0.1 * jax.random.normal(kb2, (C,), dtype=jnp.float32)

    # max_tile_p=128 forces a multi-step pixel axis even at this toy size, so
    # the accumulator + pipelined path is exercised; real shapes should use
    # the VMEM-derived default.
    out = basic_block_forward(x, w1, w2, gamma1, beta1, gamma2, beta2,
                              max_tile_p=128)
    out = jax.block_until_ready(out)
    assert out.shape == (N, C, H, W)

    # Primary check: reference with the same bf16-transport numerics.
    ref_bf16 = jax.block_until_ready(
        reference_forward(x, w1, w2, gamma1, beta1, gamma2, beta2,
                          transport_dtype=jnp.bfloat16))
    assert jnp.allclose(out, ref_bf16, atol=3e-2, rtol=3e-2), \
        "mismatch vs bf16-transport reference"

    # Sanity check vs the full-f32 reference (looser: x and MXU operands are
    # bf16 in the kernel, per the perf review).
    ref_f32 = jax.block_until_ready(
        reference_forward(x, w1, w2, gamma1, beta1, gamma2, beta2,
                          transport_dtype=jnp.float32))
    rel_l2 = jnp.linalg.norm(out - ref_f32) / jnp.linalg.norm(ref_f32)
    assert float(rel_l2) < 5e-2, "relative L2 error vs f32 reference too large"

    print("KERNEL_OK")
</pallas_src>

<mosaic_0001>
module attributes {stable_mosaic.version = 11 : i64} {
  func.func @_stats1_kernel(%arg0: i32, %arg1: i32, %arg2: memref<1x4x128xbf16, #tpu.memory_space<vmem>>, %arg3: memref<4x4xbf16, #tpu.memory_space<vmem>>, %arg4: memref<1x4x1xf32, #tpu.memory_space<vmem>>, %arg5: memref<1x4x1xf32, #tpu.memory_space<vmem>>) attributes {dimension_semantics = [#tpu.dimension_semantics<parallel>, #tpu.dimension_semantics<arbitrary>], iteration_bounds = array<i64: 2, 2>, scalar_prefetch = 0 : i64, scratch_operands = 0 : i64, tpu.core_type = #tpu.core_type<tc>, window_params = [{transform_indices = @transform_0, window_bounds = array<i64: 1, 4, 128>}, {pipeline_mode = #tpu.pipeline_mode<synchronous>, transform_indices = @transform_1, window_bounds = array<i64: 4, 4>}, {transform_indices = @transform_2, window_bounds = array<i64: 1, 4, 1>}, {transform_indices = @transform_3, window_bounds = array<i64: 1, 4, 1>}]} {
    %c0 = arith.constant 0 : index
    %c0_0 = arith.constant 0 : index
    %0 = vector.load %arg3[%c0, %c0_0] : memref<4x4xbf16, #tpu.memory_space<vmem>>, vector<4x4xbf16>
    %c0_1 = arith.constant 0 : index
    %c0_2 = arith.constant 0 : index
    %c0_3 = arith.constant 0 : index
    %1 = vector.load %arg2[%c0_1, %c0_2, %c0_3] : memref<1x4x128xbf16, #tpu.memory_space<vmem>>, vector<1x4x128xbf16>
    %2 = vector.shape_cast %1 : vector<1x4x128xbf16> to vector<4x128xbf16>
    %cst = arith.constant dense<0.000000e+00> : vector<4x128xf32>
    %3 = tpu.matmul %0, %2, %cst {dimension_numbers = #tpu.dot_dimension_numbers<[1], [0], [0], [1], [0, 0, 1, 1], [], []>} : vector<4x4xbf16>, vector<4x128xbf16>, vector<4x128xf32> -> vector<4x128xf32>
    %cst_4 = arith.constant dense<0.000000e+00> : vector<4xf32>
    %4 = vector.multi_reduction <add>, %3, %cst_4 [1] : vector<4x128xf32> to vector<4xf32>
    %5 = vector.shape_cast %4 : vector<4xf32> to vector<4x1xf32>
    %6 = arith.mulf %3, %3 : vector<4x128xf32>
    %cst_5 = arith.constant dense<0.000000e+00> : vector<4xf32>
    %7 = vector.multi_reduction <add>, %6, %cst_5 [1] : vector<4x128xf32> to vector<4xf32>
    %8 = vector.shape_cast %7 : vector<4xf32> to vector<4x1xf32>
    %c0_i32 = arith.constant 0 : i32
    %9 = arith.cmpi eq, %arg1, %c0_i32 : i32
    %10 = arith.extui %9 : i1 to i32
    %c0_i32_6 = arith.constant 0 : i32
    %11 = arith.cmpi ne, %10, %c0_i32_6 : i32
    scf.if %11 {
      %cst_19 = arith.constant 0.000000e+00 : f32
      %24 = vector.broadcast %cst_19 : f32 to vector<4x1xf32>
      %c0_20 = arith.constant 0 : index
      %c0_21 = arith.constant 0 : index
      %c0_22 = arith.constant 0 : index
      %25 = vector.load %arg4[%c0_20, %c0_21, %c0_22] : memref<1x4x1xf32, #tpu.memory_space<vmem>>, vector<1x4x1xf32>
      %26 = vector.shape_cast %25 : vector<1x4x1xf32> to vector<4x1xf32>
      %27 = vector.shape_cast %24 : vector<4x1xf32> to vector<1x4x1xf32>
      tpu.vector_store %arg4[%c0_20, %c0_21, %c0_22], %27 {strides = array<i32>} : memref<1x4x1xf32, #tpu.memory_space<vmem>>, vector<1x4x1xf32>,
      %cst_23 = arith.constant 0.000000e+00 : f32
      %28 = vector.broadcast %cst_23 : f32 to vector<4x1xf32>
      %c0_24 = arith.constant 0 : index
      %c0_25 = arith.constant 0 : index
      %c0_26 = arith.constant 0 : index
      %29 = vector.load %arg5[%c0_24, %c0_25, %c0_26] : memref<1x4x1xf32, #tpu.memory_space<vmem>>, vector<1x4x1xf32>
      %30 = vector.shape_cast %29 : vector<1x4x1xf32> to vector<4x1xf32>
      %31 = vector.shape_cast %28 : vector<4x1xf32> to vector<1x4x1xf32>
      tpu.vector_store %arg5[%c0_24, %c0_25, %c0_26], %31 {strides = array<i32>} : memref<1x4x1xf32, #tpu.memory_space<vmem>>, vector<1x4x1xf32>,
    } else {
    }
    %c0_7 = arith.constant 0 : index
    %c0_8 = arith.constant 0 : index
    %c0_9 = arith.constant 0 : index
    %12 = vector.load %arg4[%c0_7, %c0_8, %c0_9] : memref<1x4x1xf32, #tpu.memory_space<vmem>>, vector<1x4x1xf32>
    %13 = vector.shape_cast %12 : vector<1x4x1xf32> to vector<4x1xf32>
    %14 = arith.addf %13, %5 : vector<4x1xf32>
    %c0_10 = arith.constant 0 : index
    %c0_11 = arith.constant 0 : index
    %c0_12 = arith.constant 0 : index
    %15 = vector.load %arg4[%c0_10, %c0_11, %c0_12] : memref<1x4x1xf32, #tpu.memory_space<vmem>>, vector<1x4x1xf32>
    %16 = vector.shape_cast %15 : vector<1x4x1xf32> to vector<4x1xf32>
    %17 = vector.shape_cast %14 : vector<4x1xf32> to vector<1x4x1xf32>
    tpu.vector_store %arg4[%c0_10, %c0_11, %c0_12], %17 {strides = array<i32>} : memref<1x4x1xf32, #tpu.memory_space<vmem>>, vector<1x4x1xf32>,
    %c0_13 = arith.constant 0 : index
    %c0_14 = arith.constant 0 : index
    %c0_15 = arith.constant 0 : index
    %18 = vector.load %arg5[%c0_13, %c0_14, %c0_15] : memref<1x4x1xf32, #tpu.memory_space<vmem>>, vector<1x4x1xf32>
    %19 = vector.shape_cast %18 : vector<1x4x1xf32> to vector<4x1xf32>
    %20 = arith.addf %19, %8 : vector<4x1xf32>
    %c0_16 = arith.constant 0 : index
    %c0_17 = arith.constant 0 : index
    %c0_18 = arith.constant 0 : index
    %21 = vector.load %arg5[%c0_16, %c0_17, %c0_18] : memref<1x4x1xf32, #tpu.memory_space<vmem>>, vector<1x4x1xf32>
    %22 = vector.shape_cast %21 : vector<1x4x1xf32> to vector<4x1xf32>
    %23 = vector.shape_cast %20 : vector<4x1xf32> to vector<1x4x1xf32>
    tpu.vector_store %arg5[%c0_16, %c0_17, %c0_18], %23 {strides = array<i32>} : memref<1x4x1xf32, #tpu.memory_space<vmem>>, vector<1x4x1xf32>,
    return
  }
  func.func @transform_0(%arg0: i32, %arg1: i32) -> (i32, i32, i32) {
    %c0_i32 = arith.constant 0 : i32
    %c0_i32_0 = arith.constant 0 : i32
    return %arg0, %c0_i32, %arg1 : i32, i32, i32
  }
  func.func @transform_1(%arg0: i32, %arg1: i32) -> (i32, i32) {
    %c0_i32 = arith.constant 0 : i32
    %c0_i32_0 = arith.constant 0 : i32
    %c0_i32_1 = arith.constant 0 : i32
    return %c0_i32, %c0_i32_0 : i32, i32
  }
  func.func @transform_2(%arg0: i32, %arg1: i32) -> (i32, i32, i32) {
    %c0_i32 = arith.constant 0 : i32
    %c0_i32_0 = arith.constant 0 : i32
    %c0_i32_1 = arith.constant 0 : i32
    return %arg0, %c0_i32, %c0_i32_0 : i32, i32, i32
  }
  func.func @transform_3(%arg0: i32, %arg1: i32) -> (i32, i32, i32) {
    %c0_i32 = arith.constant 0 : i32
    %c0_i32_0 = arith.constant 0 : i32
    %c0_i32_1 = arith.constant 0 : i32
    return %arg0, %c0_i32, %c0_i32_0 : i32, i32, i32
  }
}

</mosaic_0001>

<llo_original>
// kernel: tpu_custom_call.1
$region0: #{tpu_custom_call.1}
  #allocation0 [shape = 'u32[]', space=smem, size = 0x4, offset = 0x4, fixed_abs, tag = 'smem constant byte address 0x4 - core index']
  #allocation1 [shape = 'u32[144,128]{1,0:T(1,128)}', space=vmem, size = 0x12000, scoped, tag = 'internal scratch']
  %s0 = inlined_call_operand.hbm [shape: bf16[2,4,256], index: 0, kind: input, shape index: {}]
  %s1 = inlined_call_operand.hbm [shape: bf16[4,4], index: 1, kind: input, shape index: {}]
  %s2 = inlined_call_operand.vmem [shape: f32[2,4,1], index: 2, kind: output, shape index: {0}]
  %s3 = inlined_call_operand.vmem [shape: f32[2,4,1], index: 3, kind: output, shape index: {1}]
  %4 = xla_tuple %s2, %s3
  %s5 = sld [smem:[#allocation0]]
  $region61: #{tpu_custom_call.1} parent=0
    _
  %s7 = ssub.s32 1, %s5
  %s8 = scalar_select 0, %s7, %s5
  $region1: #{tpu_custom_call.1} parent=0
    #allocation2 [shape = 'u8[2048]{0}', space=vmem, size = 0x800, scoped, tag = 'input window, operand 0']
    #allocation3 [shape = 's32[2]{0}', space=sflag, size = 0x8, scoped, tag = 'scoped memory for tpu_custom_call.1']
    #allocation4 [shape = 'u8[1024]{0}', space=vmem, size = 0x400, scoped, tag = 'input window, operand 1, single buffered']
    #allocation5 [shape = 's32[1]{0}', space=sflag, size = 0x4, scoped, tag = 'scoped memory for tpu_custom_call.1']
    %9 = vsyncpa [#allocation3], 0
    %s10 = scalar_lea.sflag [#allocation3], 1
    %11 = vsyncpa %s10, 0
    %12 = vsyncpa [#allocation5], 0
    loop: start=0, step=1, limit=6
    $region2: #{tpu_custom_call.1} parent=1 // loop_pre_header
      _
    $region3: #{tpu_custom_call.1} parent=1 // loop_header
      %s14 = sphi 0, %s18
      %p15 = scmp.ge.s32.totalorder %s14, 6
      %s21 = sphi 0, %s33
      %s22 = sphi 0, %s29
      %s23 = sphi 0, %s21
      %s24 = sphi 0, %s22
      %s25 = sphi 0, %s23
      %s26 = sphi 0, %s24
      %s38 = sphi 0, %s40
      %s41 = sphi 0, %s38
      %s42 = sphi 0, %s41
      %s58 = sphi 0, %s42
      %s62 = sphi 0, %s62
      %s64 = sphi 0, %s62
      %s65 = sphi 0, %s64
      %s79 = sphi 0, %s65
      %s85 = sphi 0, %s87
      %s88 = sphi 0, %s85
      %s89 = sphi 0, %s88
      %s105 = sphi 0, %s89
      %s111 = sphi 0, %s113
      %s114 = sphi 0, %s111
      %s115 = sphi 0, %s114
      %s131 = sphi 0, %s115
    $region4: #{tpu_custom_call.1} parent=1 // loop_header_branch
      %17 = sbr.rel (%p15) target = $region8
    $region5: #{tpu_custom_call.1} parent=1 // loop_body
      %s19 = ssub.s32 %s14, 1
      %s20 = ssub.s32 %s14, 2
      %s27 = sadd.s32 1, %s22
      %p28 = scmp.ge.s32.totalorder %s27, 2
      %s29 = scalar_select %p28, 0, %s27
      %s30 = sadd.s32 1, %s21
      %s31 = scalar_select %p28, %s30, %s21
      %p32 = scmp.ge.s32.totalorder %s31, 2
      %s33 = scalar_select %p32, 0, %s31
      %s34 = ssub.s32 %s21, %s33
      %s35 = ssub.s32 %s22, %s29
      %s36 = sor.u32 %s34, %s35
      %p37 = scmp.eq.s32.totalorder %s36, 0
      %s39 = sadd.s32 %s38, 1
      %s40 = scalar_select %p37, %s38, %s39
      %p43 = pneg %p37
      %p44 = scmp.eq.s32.totalorder %s14, 3
      %p45 = por %p43, %p44
      %p46 = scmp.ne.s32.totalorder %s38, %s41
      %p47 = scmp.eq.s32.totalorder %s14, 0
      %p48 = por %p46, %p47
      %p49 = scmp.ne.s32.totalorder %s38, %s41
      %p50 = scmp.eq.s32.totalorder %s19, 3
      %p51 = por %p49, %p50
      %p52 = scmp.ne.s32.totalorder %s41, %s42
      %p53 = scmp.eq.s32.totalorder %s19, 0
      %p54 = por %p52, %p53
      %p55 = scmp.ne.s32.totalorder %s41, %s42
      %p56 = scmp.eq.s32.totalorder %s20, 3
      %p57 = por %p55, %p56
      %p59 = scmp.ne.s32.totalorder %s42, %s58
      %p60 = scmp.eq.s32.totalorder %s20, 0
      %p61 = por %p59, %p60
      %s63 = sadd.s32 %s62, 1
      %p66 = scmp.eq.s32.totalorder %s14, 3
      %p67 = scmp.ne.s32.totalorder %s62, %s64
      %p68 = scmp.eq.s32.totalorder %s14, 0
      %p69 = por %p67, %p68
      %p70 = scmp.ne.s32.totalorder %s62, %s64
      %p71 = scmp.eq.s32.totalorder %s19, 3
      %p72 = por %p70, %p71
      %p73 = scmp.ne.s32.totalorder %s64, %s65
      %p74 = scmp.eq.s32.totalorder %s19, 0
      %p75 = por %p73, %p74
      %p76 = scmp.ne.s32.totalorder %s64, %s65
      %p77 = scmp.eq.s32.totalorder %s20, 3
      %p78 = por %p76, %p77
      %p80 = scmp.ne.s32.totalorder %s65, %s79
      %p81 = scmp.eq.s32.totalorder %s20, 0
      %p82 = por %p80, %p81
      %s83 = ssub.s32 %s21, %s33
      %p84 = scmp.eq.s32.totalorder %s83, 0
      %s86 = sadd.s32 %s85, 1
      %s87 = scalar_select %p84, %s85, %s86
      %p90 = pneg %p84
      %p91 = scmp.eq.s32.totalorder %s14, 3
      %p92 = por %p90, %p91
      %p93 = scmp.ne.s32.totalorder %s85, %s88
      %p94 = scmp.eq.s32.totalorder %s14, 0
      %p95 = por %p93, %p94
      %p96 = scmp.ne.s32.totalorder %s85, %s88
      %p97 = scmp.eq.s32.totalorder %s19, 3
      %p98 = por %p96, %p97
      %p99 = scmp.ne.s32.totalorder %s88, %s89
      %p100 = scmp.eq.s32.totalorder %s19, 0
      %p101 = por %p99, %p100
      %p102 = scmp.ne.s32.totalorder %s88, %s89
      %p103 = scmp.eq.s32.totalorder %s20, 3
      %p104 = por %p102, %p103
      %p106 = scmp.ne.s32.totalorder %s89, %s105
      %p107 = scmp.eq.s32.totalorder %s20, 0
      %p108 = por %p106, %p107
      %s109 = ssub.s32 %s21, %s33
      %p110 = scmp.eq.s32.totalorder %s109, 0
      %s112 = sadd.s32 %s111, 1
      %s113 = scalar_select %p110, %s111, %s112
      %p116 = pneg %p110
      %p117 = scmp.eq.s32.totalorder %s14, 3
      %p118 = por %p116, %p117
      %p119 = scmp.ne.s32.totalorder %s111, %s114
      %p120 = scmp.eq.s32.totalorder %s14, 0
      %p121 = por %p119, %p120
      %p122 = scmp.ne.s32.totalorder %s111, %s114
      %p123 = scmp.eq.s32.totalorder %s19, 3
      %p124 = por %p122, %p123
      %p125 = scmp.ne.s32.totalorder %s114, %s115
      %p126 = scmp.eq.s32.totalorder %s19, 0
      %p127 = por %p125, %p126
      %p128 = scmp.ne.s32.totalorder %s114, %s115
      %p129 = scmp.eq.s32.totalorder %s20, 3
      %p130 = por %p128, %p129
      %p132 = scmp.ne.s32.totalorder %s115, %s131
      %p133 = scmp.eq.s32.totalorder %s20, 0
      %p134 = por %p132, %p133
      %p135 = scmp.le.s32.totalorder 1, %s14
      %p136 = scmp.lt.s32.totalorder %s14, 5
      %p137 = pnand %p135, %p136
      %p138 = pneg %p137
      // Predicated region
      $region9: #{tpu_custom_call.1} parent=5 // pred_check
        _
      $region10: #{tpu_custom_call.1} parent=5 // pred_check_branch
        %140 = sbr.rel (%p137) target = $region12
      $region11: #{tpu_custom_call.1} parent=5 // pred_region
        %s141 = ssub.s32 %s14, 1
        // Predicated region
        $region13: #{tpu_custom_call.1} parent=11 // pred_check
          %p142 = pneg %p75
        $region14: #{tpu_custom_call.1} parent=11 // pred_check_branch
          %144 = sbr.rel (%p142) target = $region16
        $region15: #{tpu_custom_call.1} parent=11 // pred_region
          %s146 = ssub.s32 32, 32
          %147 = vsyncadd [#allocation5], %s146
          %s149 = sshll.u32 [#allocation4], 4
          %s150 = int_to_ptr.vmem [resolvable:$true] %s149
          %152 = dma.hbm_to_vmem [thread:$0]  %s1, 32, %s150, [#allocation5]
        $region16: #{tpu_custom_call.1} parent=11 // pred_fallthru
          _
      $region12: #{tpu_custom_call.1} parent=5 // pred_fallthru
        _
      %p153 = scmp.lt.s32.totalorder %s14, 4
      // Predicated region
      $region17: #{tpu_custom_call.1} parent=5 // pred_check
        %p154 = pneg %p153
      $region18: #{tpu_custom_call.1} parent=5 // pred_check_branch
        %156 = sbr.rel (%p154) target = $region20
      $region19: #{tpu_custom_call.1} parent=5 // pred_region
        // Predicated region
        $region21: #{tpu_custom_call.1} parent=19 // pred_check
          %p157 = pneg %p48
        $region22: #{tpu_custom_call.1} parent=19 // pred_check_branch
          %159 = sbr.rel (%p157) target = $region24
        $region23: #{tpu_custom_call.1} parent=19 // pred_region
          %s160 = sand.u32 %s38, 1
          %s161 = scalar_lea.sflag [#allocation3], %s160
          %s162 = sand.u32 %s38, 1
          %s163 = smul.addr %s162, 2
          %s164 = scalar_lea.vmem [#allocation2], %s163
          %s166 = ssub.s32 32, 32
          %167 = vsyncadd %s161, %s166
          %s168 = smul.addr %s21, 2
          %s169 = sadd.s32 %s22, %s168
          %s170 = smul.addr %s169, 32
          %s171 = scalar_lea.hbm %s0, %s170
          %s173 = sshll.u32 %s164, 4
          %s174 = int_to_ptr.vmem [resolvable:$true] %s173
          %176 = dma.hbm_to_vmem [thread:$0]  %s171, 32, %s174, %s161
        $region24: #{tpu_custom_call.1} parent=19 // pred_fallthru
          _
      $region20: #{tpu_custom_call.1} parent=5 // pred_fallthru
        _
      %p177 = scmp.le.s32.totalorder 1, %s14
      %p178 = scmp.lt.s32.totalorder %s14, 5
      %p179 = pnand %p177, %p178
      %p180 = pneg %p179
      // Predicated region
      $region25: #{tpu_custom_call.1} parent=5 // pred_check
        _
      $region26: #{tpu_custom_call.1} parent=5 // pred_check_branch
        %182 = sbr.rel (%p179) target = $region28
      $region27: #{tpu_custom_call.1} parent=5 // pred_region
        %s183 = ssub.s32 %s14, 1
        %s184 = sand.u32 %s41, 1
        %s185 = scalar_lea.sflag [#allocation3], %s184
        %s186 = sand.u32 %s41, 1
        %s187 = smul.addr %s186, 2
        %s188 = scalar_lea.vmem [#allocation2], %s187
        // Predicated region
        $region29: #{tpu_custom_call.1} parent=27 // pred_check
          %p189 = pneg %p54
        $region30: #{tpu_custom_call.1} parent=27 // pred_check_branch
          %191 = sbr.rel (%p189) target = $region32
        $region31: #{tpu_custom_call.1} parent=27 // pred_region
          %192 = dma.done %s185, 32
        $region32: #{tpu_custom_call.1} parent=27 // pred_fallthru
          _
        // Predicated region
        $region33: #{tpu_custom_call.1} parent=27 // pred_check
          %p193 = pneg %p75
        $region34: #{tpu_custom_call.1} parent=27 // pred_check_branch
          %195 = sbr.rel (%p193) target = $region36
        $region35: #{tpu_custom_call.1} parent=27 // pred_region
          %196 = dma.done [#allocation5], 32
        $region36: #{tpu_custom_call.1} parent=27 // pred_fallthru
          _
        %s197 = sand.u32 %s41, 1
        %s198 = scalar_lea.sflag [#allocation3], %s197
        %s199 = sand.u32 %s41, 1
        %s200 = smul.addr %s199, 2
        %s201 = scalar_lea.vmem [#allocation2], %s200
        %p202 = pneg %p54
        %p203 = pneg %p51
        %p204 = pneg %p75
        %p205 = pneg %p72
        %p206 = pneg %p101
        %p207 = pneg %p98
        %p208 = scmp.lt.s32.totalorder %s23, 1
        %s209 = scalar_select %p208, %s23, 1
        %s210 = smul.addr %s209, 4
        %s211 = scalar_lea.vmem %s2, %s210
        %p212 = pneg %p127
        %p213 = pneg %p124
        %p214 = scmp.lt.s32.totalorder %s23, 1
        %s215 = scalar_select %p214, %s23, 1
        %s216 = smul.addr %s215, 4
        %s217 = scalar_lea.vmem %s3, %s216
        %p218 = scmp.lt.s32.totalorder %s23, 1
        %s219 = scalar_select %p218, %s23, 1
        %s220 = smul.addr %s219, 4
        %s221 = scalar_lea.vmem %s2, %s220
        %p222 = scmp.lt.s32.totalorder %s23, 1
        %s223 = scalar_select %p222, %s23, 1
        %s224 = smul.addr %s223, 4
        %s225 = scalar_lea.vmem %s3, %s224
        %v227 = vld [vmem:[#allocation4] sm:$0x3]
        %v228 = vld [vmem:[%s188] sm:$0x3]
        %vm229 = vcmask 31744
        %v231 = vsel %vm229, %v227, 0
        %vm233 = vcmask 1041408
        %v235 = vsel %vm233, %v228, 0
        %237 = vmatprep.subr.bf16.mxu0 0
        %238 = vmatpush1.bf16.msra.mxu0 0
        %239 = vmatprep.subr.bf16.mxu0 0
        %240 = vmatpush1.bf16.msra.mxu0 0
        %241 = vmatprep.subr.bf16.mxu0 0
        %242 = vmatpush1.bf16.msra.mxu0 0
        %243 = vmatprep.subr.bf16.mxu0 0
        %244 = vmatpush1.bf16.msra.mxu0 0
        %245 = vmatprep.subr.bf16.mxu0 0
        %246 = vmatpush1.bf16.msra.mxu0 0
        %247 = vmatprep.subr.bf16.mxu0 0
        %248 = vmatpush1.bf16.msra.mxu0 0
        %249 = vmatprep.subr.bf16.mxu0 0
        %250 = vmatpush1.bf16.msra.mxu0 0
        %251 = vmatprep.subr.bf16.mxu0 0
        %252 = vmatpush1.bf16.msra.mxu0 %v235
        %253 = vmatprep.subr.bf16.mxu0 0
        %254 = vmatpush2.bf16.msra.mxu0 0
        %255 = vmatprep.subr.bf16.mxu0 0
        %256 = vmatpush2.bf16.msra.mxu0 0
        %257 = vmatprep.subr.bf16.mxu0 0
        %258 = vmatpush2.bf16.msra.mxu0 0
        %259 = vmatprep.subr.bf16.mxu0 0
        %260 = vmatpush2.bf16.msra.mxu0 0
        %261 = vmatprep.subr.bf16.mxu0 0
        %262 = vmatpush2.bf16.msra.mxu0 0
        %263 = vmatprep.subr.bf16.mxu0 0
        %264 = vmatpush2.bf16.msra.mxu0 0
        %265 = vmatprep.subr.bf16.mxu0 0
        %266 = vmatpush2.bf16.msra.mxu0 0
        %267 = vmatprep.subr.bf16.mxu0 0
        %268 = vmatpush2.bf16.msra.mxu0 0
        %269 = vmatprep.mubr.bf16.mxu0 0
        %270 = vmatmul.mubr.bf16.gmra.mxu0 %v231
        %v271 = vpop.f32.mrf.mxu0
        %v272 = vadd.f32 0.0, %v271
        %v273 = vpop.f32.mrf.mxu0
        %v274 = vpop.f32.mrf.mxu0
        %v275 = vpop.f32.mrf.mxu0
        %276 = vdwg.mxu0
        %vm277 = vcmask 1043456
        %v278 = vsel %vm277, %v272, 0.0
        %279 = vadd.xlane.f32.xlu0 %v278
        %v280 = vpop.xlane.xlu0 %279
        %v281 = vmul.f32 %v272, %v272
        %v282 = vsel %vm277, %v281, 0.0
        %283 = vadd.xlane.f32.xlu0 %v282
        %v284 = vpop.xlane.xlu0 %283
        %p285 = scmp.eq.s32.totalorder %s24, 0
        // Predicated region
        $region37: #{tpu_custom_call.1} parent=27 // pred_check
          %p286 = pneg %p285
        $region38: #{tpu_custom_call.1} parent=27 // pred_check_branch
          %288 = sbr.rel (%p286) target = $region40
        $region39: #{tpu_custom_call.1} parent=27 // pred_region
          %vm289 = vcmask 3072
          %290 = vst.msk [vmem:[%s221] sm:$0xf] %vm289, 0.0
          %291 = vst.msk [vmem:[%s225] sm:$0xf] %vm289, 0.0
        $region40: #{tpu_custom_call.1} parent=27 // pred_fallthru
          _
        %v292 = vld [vmem:[%s221] sm:$0xf]
        %v293 = vadd.f32 %v292, %v280
        %vm294 = vcmask 3072
        %295 = vst.msk [vmem:[%s221] sm:$0xf] %vm294, %v293
        %v296 = vld [vmem:[%s225] sm:$0xf]
        %v297 = vadd.f32 %v296, %v284
        %298 = vst.msk [vmem:[%s225] sm:$0xf] %vm294, %v297
        %p299 = scmp.lt.s32.totalorder %s23, 1
        %s300 = scalar_select %p299, %s23, 1
        %s301 = smul.addr %s300, 4
        %s302 = scalar_lea.vmem %s2, %s301
        %p303 = scmp.lt.s32.totalorder %s23, 1
        %s304 = scalar_select %p303, %s23, 1
        %s305 = smul.addr %s304, 4
        %s306 = scalar_lea.vmem %s3, %s305
        // Predicated region
        $region41: #{tpu_custom_call.1} parent=27 // pred_check
          %p307 = pneg %p98
        $region42: #{tpu_custom_call.1} parent=27 // pred_check_branch
          %309 = sbr.rel (%p307) target = $region44
        $region43: #{tpu_custom_call.1} parent=27 // pred_region
          _
        $region44: #{tpu_custom_call.1} parent=27 // pred_fallthru
          _
        // Predicated region
        $region45: #{tpu_custom_call.1} parent=27 // pred_check
          %p310 = pneg %p124
        $region46: #{tpu_custom_call.1} parent=27 // pred_check_branch
          %312 = sbr.rel (%p310) target = $region48
        $region47: #{tpu_custom_call.1} parent=27 // pred_region
          _
        $region48: #{tpu_custom_call.1} parent=27 // pred_fallthru
          _
      $region28: #{tpu_custom_call.1} parent=5 // pred_fallthru
        _
      %p313 = scmp.le.s32.totalorder 2, %s14
      // Predicated region
      $region49: #{tpu_custom_call.1} parent=5 // pred_check
        %p314 = pneg %p313
      $region50: #{tpu_custom_call.1} parent=5 // pred_check_branch
        %316 = sbr.rel (%p314) target = $region52
      $region51: #{tpu_custom_call.1} parent=5 // pred_region
        %s317 = ssub.s32 %s14, 2
        // Predicated region
        $region53: #{tpu_custom_call.1} parent=51 // pred_check
          %p318 = pneg %p104
        $region54: #{tpu_custom_call.1} parent=51 // pred_check_branch
          %320 = sbr.rel (%p318) target = $region56
        $region55: #{tpu_custom_call.1} parent=51 // pred_region
          %p321 = scmp.lt.s32.totalorder %s25, 1
          %s322 = scalar_select %p321, %s25, 1
          %s323 = smul.addr %s322, 4
          %s324 = scalar_lea.vmem %s2, %s323
        $region56: #{tpu_custom_call.1} parent=51 // pred_fallthru
          _
        // Predicated region
        $region57: #{tpu_custom_call.1} parent=51 // pred_check
          %p325 = pneg %p130
        $region58: #{tpu_custom_call.1} parent=51 // pred_check_branch
          %327 = sbr.rel (%p325) target = $region60
        $region59: #{tpu_custom_call.1} parent=51 // pred_region
          %p328 = scmp.lt.s32.totalorder %s25, 1
          %s329 = scalar_select %p328, %s25, 1
          %s330 = smul.addr %s329, 4
          %s331 = scalar_lea.vmem %s3, %s330
        $region60: #{tpu_custom_call.1} parent=51 // pred_fallthru
          _
      $region52: #{tpu_custom_call.1} parent=5 // pred_fallthru
        _
    $region6: #{tpu_custom_call.1} parent=1 // loop_footer
      %s18 = sadd.s32 1, %s14
    $region7: #{tpu_custom_call.1} parent=1 // loop_footer_branch
      %13 = sbr.rel target = $region3
    $region8: #{tpu_custom_call.1} parent=1 // loop_exit
      _
    %332 = vsyncpa [#allocation3], 1
    %s333 = scalar_lea.sflag [#allocation3], 1
    %334 = vsyncpa %s333, 1
    %335 = vsyncpa [#allocation5], 1

</llo_original>
